<compile_context>
chip_gen: v7x
topology: tpu7x:2x2x1
jax: 0.10.0
libtpu: 0.0.40
codegen_flags: <defaults>
</compile_context>

<pallas_src>
import functools

import numpy as np
import jax
import jax.numpy as jnp
from jax import lax
from jax.experimental import pallas as pl
from jax.experimental.pallas import tpu as pltpu


_LOG2_E = 1.4426950408889634  # log2(e)


def _sdpa_kernel(*refs, q_scale, heads_per_block, has_mask, has_attn, mask_h_bcast):
    q_ref, k_ref, v_ref = refs[:3]
    pos = 3
    mask_ref = None
    if has_mask:
        mask_ref = refs[pos]
        pos += 1
    out_ref = refs[pos]
    pos += 1
    attn_ref = refs[pos] if has_attn else None

    for j in range(heads_per_block):          # static unroll over the packed head group
        # Fold (1/scale_factor)*log2(e) into the small [tq,D] q operand instead of
        # multiplying the [tq,Lk] score matrix (Lk/D fewer elementwise mults); scores
        # then come out in log2 units so the softmax numerator is a native EUP exp2.
        q = q_ref[0, j] * jnp.asarray(q_scale, q_ref.dtype)   # [tq, D] native dtype
        k = k_ref[0, j]                                       # [Lk, D]
        v = v_ref[0, j]                                       # [Lk, Dv]

        # q @ k^T without materializing k.T: contract the last dims directly.
        scores = lax.dot_general(
            q, k, dimension_numbers=(((1,), (1,)), ((), ())),
            preferred_element_type=jnp.float32)               # [tq, Lk] f32 (log2 units)

        if mask_ref is not None:
            m = mask_ref[0, 0 if mask_h_bcast else j]         # [tq or 1, Lk] int8
            scores = jnp.where(m != 0, jnp.float32(-1000000000.0), scores)

        # Numerically stable softmax over the full Lk (exact, no online softmax).
        smax = jnp.max(scores, axis=-1, keepdims=True)
        unnorm = jnp.exp2(scores - smax)                      # EUP exp2, [tq, Lk]
        denom = jnp.sum(unnorm, axis=-1, keepdims=True)       # [tq, 1]
        inv = pl.reciprocal(denom, approx=True)               # EUP slot (off the VPU)
        inv = inv * (2.0 - denom * inv)                       # 1 Newton step on [tq,1] only

        if attn_ref is not None:
            attn = unnorm * inv                               # normalized attention
            attn_ref[0, j] = attn.astype(attn_ref.dtype)
            p = attn.astype(v.dtype)
            o = lax.dot_general(p, v, dimension_numbers=(((1,), (0,)), ((), ())),
                                preferred_element_type=jnp.float32)      # [tq, Dv]
        else:
            # Fast path: normalize the [tq,Dv] result instead of the [tq,Lk] matrix.
            p = unnorm.astype(v.dtype)
            o = lax.dot_general(p, v, dimension_numbers=(((1,), (0,)), ((), ())),
                                preferred_element_type=jnp.float32) * inv
        out_ref[0, j] = o.astype(out_ref.dtype)


def _pick_heads_per_block(H, Dv):
    """Pack a few heads per grid step to amortize per-step overhead and enlarge the
    K/V DMAs; the smallest group with hh*Dv a multiple of 128 lanes is plenty."""
    for hh in range(1, min(H, 8) + 1):
        if H % hh == 0 and (hh * Dv) % 128 == 0:
            return hh
    return 1


def _step_vmem_bytes(tq, Lk, D, Dv, hh, in_bytes, out_bytes, attn_bytes, mask_bytes):
    """Rough per-grid-step VMEM footprint (double-buffered blocks + f32 temporaries)."""
    b = 2 * hh * Lk * (D + Dv) * in_bytes       # K + V blocks for the head group
    b += 2 * hh * tq * D * in_bytes             # q block
    b += 2 * hh * tq * Dv * out_bytes           # output block
    b += 2 * hh * tq * Lk * mask_bytes          # mask block (0 if no mask)
    b += 2 * hh * tq * Lk * attn_bytes          # attn block (0 if not returned)
    b += 3 * hh * tq * Lk * 4                   # f32 scores / softmax temporaries
    return b


def _vmem_budget_and_cap():
    """Chip-aware VMEM sizing: large tiles on 128 MiB parts (v5e/v6e), headroom on
    v7x's 64 MiB part."""
    try:
        phys = int(pltpu.get_tpu_info().vmem_capacity_bytes)
    except Exception:
        phys = 64 * 1024 * 1024                    # conservative (v7x-sized) fallback
    if phys >= 100 * 1024 * 1024:                  # v5e / v6e: 128 MiB physical VMEM
        return 56 * 1024 * 1024, 96 * 1024 * 1024
    return 26 * 1024 * 1024, 40 * 1024 * 1024      # v7x: 64 MiB physical VMEM


def _pick_block_q(Lq, Lk, D, Dv, hh, in_bytes, out_bytes, attn_bytes, mask_bytes, budget):
    """Largest Lq tile whose working set fits the (chip-aware) VMEM budget."""
    for tq in (512, 256, 128, 64, 32, 16, 8):
        if Lq % tq == 0 and _step_vmem_bytes(
                tq, Lk, D, Dv, hh, in_bytes, out_bytes, attn_bytes, mask_bytes) <= budget:
            return tq
    # TODO(synk): extremely long Lk would need an Lk grid axis + online softmax here.
    return Lq   # tiny or awkward Lq: take it whole


def scaled_dot_product_attention(q, k, v, scale_factor, mask=None, *,
                                 return_attn=True, attn_dtype=None,
                                 block_q=None, heads_per_block=None):
    """Pallas TPU implementation of ScaledDotProductAttention.forward (eval mode).

    return_attn=False skips the O(Lq*Lk) attention-matrix writeback (fast path).
    attn_dtype=jnp.bfloat16 halves that writeback when the matrix is needed.
    """
    B, H, Lq, D = q.shape
    Lk = k.shape[2]
    Dv = v.shape[3]

    hh = heads_per_block if heads_per_block is not None else _pick_heads_per_block(H, Dv)
    if H % hh != 0:
        hh = 1
    Hb = H // hh

    attn_dt = jnp.dtype(attn_dtype) if attn_dtype is not None else q.dtype
    in_bytes = q.dtype.itemsize
    out_bytes = q.dtype.itemsize
    attn_bytes = jnp.dtype(attn_dt).itemsize if return_attn else 0

    if mask is not None:
        if mask.ndim == 3:                      # [B, Lq, Lk] -> [B, 1, Lq, Lk]
            mask = mask[:, None]
        mB, mH, mLq, mLk = mask.shape
        assert mLk == Lk and mB in (1, B) and mH in (1, H) and mLq in (1, Lq), \
            "mask must be broadcastable to [B, H, Lq, Lk]"
        mask = (mask == 1).astype(jnp.int8)     # masked positions -> 1; 4x less traffic
    mask_bytes = 1 if mask is not None else 0

    budget, cap = _vmem_budget_and_cap()
    tq = block_q if block_q is not None else _pick_block_q(
        Lq, Lk, D, Dv, hh, in_bytes, out_bytes, attn_bytes, mask_bytes, budget)
    if Lq % tq != 0:
        tq = Lq
    nq = Lq // tq

    est = _step_vmem_bytes(tq, Lk, D, Dv, hh, in_bytes, out_bytes, attn_bytes, mask_bytes)
    vmem_limit = min(cap, max(32 * 1024 * 1024, int(1.5 * est)))

    kernel = functools.partial(
        _sdpa_kernel,
        q_scale=float(_LOG2_E / scale_factor),
        heads_per_block=hh,
        has_mask=mask is not None,
        has_attn=return_attn,
        mask_h_bcast=(mask is not None and mask.shape[1] == 1),
    )

    in_specs = [
        pl.BlockSpec((1, hh, tq, D), lambda b, hb, i: (b, hb, i, 0)),
        pl.BlockSpec((1, hh, Lk, D), lambda b, hb, i: (b, hb, 0, 0)),
        pl.BlockSpec((1, hh, Lk, Dv), lambda b, hb, i: (b, hb, 0, 0)),
    ]
    args = [q, k, v]
    if mask is not None:
        mh = hh if mH != 1 else 1
        mq = tq if mLq != 1 else 1
        b_full, h_full, q_full = mB != 1, mH != 1, mLq != 1
        in_specs.append(pl.BlockSpec(
            (1, mh, mq, Lk),
            lambda b, hb, i, _bf=b_full, _hf=h_full, _qf=q_full:
                (b if _bf else 0, hb if _hf else 0, i if _qf else 0, 0)))
        args.append(mask)

    # Output written directly in the module-faithful [B, H, Lq, Dv] layout.
    out_spec = pl.BlockSpec((1, hh, tq, Dv), lambda b, hb, i: (b, hb, i, 0))
    out_shape = jax.ShapeDtypeStruct((B, H, Lq, Dv), q.dtype)
    if return_attn:
        out_specs = (out_spec,
                     pl.BlockSpec((1, hh, tq, Lk), lambda b, hb, i: (b, hb, i, 0)))
        out_shapes = (out_shape, jax.ShapeDtypeStruct((B, H, Lq, Lk), attn_dt))
    else:
        out_specs = out_spec
        out_shapes = out_shape

    result = pl.pallas_call(
        kernel,
        grid=(B, Hb, nq),
        in_specs=in_specs,
        out_specs=out_specs,
        out_shape=out_shapes,
        compiler_params=pltpu.CompilerParams(
            # Megacore sharding on B / head-group only; the Lq axis is "arbitrary" so
            # each core owns a contiguous run and the K/V blocks (constant along Lq)
            # stay VMEM-resident instead of being re-DMA'd.
            dimension_semantics=("parallel", "parallel", "arbitrary"),
            vmem_limit_bytes=vmem_limit,
        ),
    )(*args)

    if return_attn:
        out, attn = result
        return out, attn
    return result


def _reference(q, k, v, scale_factor, mask=None):
    attn = jnp.matmul(q / scale_factor, jnp.swapaxes(k, 2, 3))
    if mask is not None:
        attn = jnp.where(mask == 1, -1000000000.0, attn)
    attn = jax.nn.softmax(attn, axis=-1)
    out = jnp.matmul(attn, v)
    return out, attn


if __name__ == "__main__":
    # Small shapes consistent with the module constants (n_head=8, d_k=d_v=64).
    B, H, L, D = 2, 8, 16, 64
    scale_factor = float(D) ** 0.5

    key = jax.random.PRNGKey(0)
    kq, kk, kv, km = jax.random.split(key, 4)
    q = jax.random.normal(kq, (B, H, L, D), dtype=jnp.float32)
    k = jax.random.normal(kk, (B, H, L, D), dtype=jnp.float32)
    v = jax.random.normal(kv, (B, H, L, D), dtype=jnp.float32)
    # Broadcastable mask [B, 1, Lq, Lk] (1 == masked out), exactly as
    # MultiHeadAttention passes it after mask.unsqueeze(1).
    mask = (jax.random.uniform(km, (B, 1, L, L)) > 0.7).astype(jnp.int32)

    # Module-faithful path: masked, attention matrix returned.
    out, attn = scaled_dot_product_attention(q, k, v, scale_factor, mask)
    out = jax.block_until_ready(out)
    attn = jax.block_until_ready(attn)
    ref_out, ref_attn = _reference(q, k, v, scale_factor, mask)
    assert jnp.allclose(out, ref_out, atol=1e-5, rtol=1e-5), "output mismatch (masked)"
    assert jnp.allclose(attn, ref_attn, atol=1e-5, rtol=1e-5), "attn mismatch (masked)"

    # Fast path: no mask, no attention-matrix writeback.
    out2 = scaled_dot_product_attention(q, k, v, scale_factor, None, return_attn=False)
    out2 = jax.block_until_ready(out2)
    ref_out2, _ = _reference(q, k, v, scale_factor, None)
    assert jnp.allclose(out2, ref_out2, atol=1e-5, rtol=1e-5), "output mismatch (no mask)"

    # Un-grouped (heads_per_block=1) fallback path.
    out3, attn3 = scaled_dot_product_attention(q, k, v, scale_factor, mask, heads_per_block=1)
    out3 = jax.block_until_ready(out3)
    assert jnp.allclose(out3, ref_out, atol=1e-5, rtol=1e-5), "output mismatch (hh=1)"
    assert jnp.allclose(attn3, ref_attn, atol=1e-5, rtol=1e-5), "attn mismatch (hh=1)"

    print("KERNEL_OK")
</pallas_src>

<mosaic_0001>
module attributes {stable_mosaic.version = 11 : i64} {
  func.func @_sdpa_kernel(%arg0: i32, %arg1: i32, %arg2: i32, %arg3: memref<1x2x16x64xf32, #tpu.memory_space<vmem>>, %arg4: memref<1x2x16x64xf32, #tpu.memory_space<vmem>>, %arg5: memref<1x2x16x64xf32, #tpu.memory_space<vmem>>, %arg6: memref<1x1x16x16xi8, #tpu.memory_space<vmem>>, %arg7: memref<1x2x16x64xf32, #tpu.memory_space<vmem>>, %arg8: memref<1x2x16x16xf32, #tpu.memory_space<vmem>>) attributes {dimension_semantics = [#tpu.dimension_semantics<parallel>, #tpu.dimension_semantics<parallel>, #tpu.dimension_semantics<arbitrary>], iteration_bounds = array<i64: 2, 4, 1>, scalar_prefetch = 0 : i64, scratch_operands = 0 : i64, tpu.core_type = #tpu.core_type<tc>, window_params = [{transform_indices = @transform_0, window_bounds = array<i64: 1, 2, 16, 64>}, {transform_indices = @transform_1, window_bounds = array<i64: 1, 2, 16, 64>}, {transform_indices = @transform_2, window_bounds = array<i64: 1, 2, 16, 64>}, {transform_indices = @transform_3, window_bounds = array<i64: 1, 1, 16, 16>}, {transform_indices = @transform_4, window_bounds = array<i64: 1, 2, 16, 64>}, {transform_indices = @transform_5, window_bounds = array<i64: 1, 2, 16, 16>}]} {
    %c0 = arith.constant 0 : index
    %c0_0 = arith.constant 0 : index
    %c0_1 = arith.constant 0 : index
    %c0_2 = arith.constant 0 : index
    %0 = vector.load %arg3[%c0, %c0_0, %c0_1, %c0_2] : memref<1x2x16x64xf32, #tpu.memory_space<vmem>>, vector<1x1x16x64xf32>
    %1 = vector.shape_cast %0 : vector<1x1x16x64xf32> to vector<16x64xf32>
    %cst = arith.constant 0.180336878 : f32
    %2 = vector.broadcast %cst : f32 to vector<16x64xf32>
    %3 = arith.mulf %1, %2 : vector<16x64xf32>
    %c0_3 = arith.constant 0 : index
    %c0_4 = arith.constant 0 : index
    %c0_5 = arith.constant 0 : index
    %c0_6 = arith.constant 0 : index
    %4 = vector.load %arg4[%c0_3, %c0_4, %c0_5, %c0_6] : memref<1x2x16x64xf32, #tpu.memory_space<vmem>>, vector<1x1x16x64xf32>
    %5 = vector.shape_cast %4 : vector<1x1x16x64xf32> to vector<16x64xf32>
    %c0_7 = arith.constant 0 : index
    %c0_8 = arith.constant 0 : index
    %c0_9 = arith.constant 0 : index
    %c0_10 = arith.constant 0 : index
    %6 = vector.load %arg5[%c0_7, %c0_8, %c0_9, %c0_10] : memref<1x2x16x64xf32, #tpu.memory_space<vmem>>, vector<1x1x16x64xf32>
    %7 = vector.shape_cast %6 : vector<1x1x16x64xf32> to vector<16x64xf32>
    %cst_11 = arith.constant dense<0.000000e+00> : vector<16x16xf32>
    %8 = tpu.matmul %3, %5, %cst_11 {dimension_numbers = #tpu.dot_dimension_numbers<[1], [1], [0], [0], [0, 0, 1, 0], [], []>} : vector<16x64xf32>, vector<16x64xf32>, vector<16x16xf32> -> vector<16x16xf32>
    %c0_12 = arith.constant 0 : index
    %c0_13 = arith.constant 0 : index
    %c0_14 = arith.constant 0 : index
    %c0_15 = arith.constant 0 : index
    %9 = vector.load %arg6[%c0_12, %c0_13, %c0_14, %c0_15] : memref<1x1x16x16xi8, #tpu.memory_space<vmem>>, vector<1x1x16x16xi8>
    %10 = vector.shape_cast %9 : vector<1x1x16x16xi8> to vector<16x16xi8>
    %c0_i8 = arith.constant 0 : i8
    %11 = vector.broadcast %c0_i8 : i8 to vector<16x16xi8>
    %12 = arith.cmpi ne, %10, %11 : vector<16x16xi8>
    %cst_16 = arith.constant -1.000000e+09 : f32
    %13 = vector.broadcast %cst_16 : f32 to vector<16x16xf32>
    %14 = arith.select %12, %13, %8 : vector<16x16xi1>, vector<16x16xf32>
    %cst_17 = arith.constant dense<0xFF800000> : vector<16xf32>
    %15 = vector.multi_reduction <maximumf>, %14, %cst_17 [1] : vector<16x16xf32> to vector<16xf32>
    %16 = vector.shape_cast %15 : vector<16xf32> to vector<16x1xf32>
    %17 = vector.broadcast %16 : vector<16x1xf32> to vector<16x16xf32>
    %18 = arith.subf %14, %17 : vector<16x16xf32>
    %19 = math.exp2 %18 : vector<16x16xf32>
    %cst_18 = arith.constant dense<0.000000e+00> : vector<16xf32>
    %20 = vector.multi_reduction <add>, %19, %cst_18 [1] : vector<16x16xf32> to vector<16xf32>
    %21 = vector.shape_cast %20 : vector<16xf32> to vector<16x1xf32>
    %22 = tpu.reciprocal %21 {approx = true} : vector<16x1xf32> -> vector<16x1xf32>
    %23 = arith.mulf %21, %22 : vector<16x1xf32>
    %cst_19 = arith.constant 2.000000e+00 : f32
    %24 = vector.broadcast %cst_19 : f32 to vector<16x1xf32>
    %25 = arith.subf %24, %23 : vector<16x1xf32>
    %26 = arith.mulf %22, %25 : vector<16x1xf32>
    %27 = vector.broadcast %26 : vector<16x1xf32> to vector<16x16xf32>
    %28 = arith.mulf %19, %27 : vector<16x16xf32>
    %c0_20 = arith.constant 0 : index
    %c0_21 = arith.constant 0 : index
    %c0_22 = arith.constant 0 : index
    %c0_23 = arith.constant 0 : index
    %29 = vector.load %arg8[%c0_20, %c0_21, %c0_22, %c0_23] : memref<1x2x16x16xf32, #tpu.memory_space<vmem>>, vector<1x1x16x16xf32>
    %30 = vector.shape_cast %29 : vector<1x1x16x16xf32> to vector<16x16xf32>
    %31 = vector.shape_cast %28 : vector<16x16xf32> to vector<1x1x16x16xf32>
    tpu.vector_store %arg8[%c0_20, %c0_21, %c0_22, %c0_23], %31 {strides = array<i32>} : memref<1x2x16x16xf32, #tpu.memory_space<vmem>>, vector<1x1x16x16xf32>,
    %cst_24 = arith.constant dense<0.000000e+00> : vector<16x64xf32>
    %32 = tpu.matmul %28, %7, %cst_24 {dimension_numbers = #tpu.dot_dimension_numbers<[1], [0], [0], [1], [0, 0, 1, 1], [], []>} : vector<16x16xf32>, vector<16x64xf32>, vector<16x64xf32> -> vector<16x64xf32>
    %c0_25 = arith.constant 0 : index
    %c0_26 = arith.constant 0 : index
    %c0_27 = arith.constant 0 : index
    %c0_28 = arith.constant 0 : index
    %33 = vector.load %arg7[%c0_25, %c0_26, %c0_27, %c0_28] : memref<1x2x16x64xf32, #tpu.memory_space<vmem>>, vector<1x1x16x64xf32>
    %34 = vector.shape_cast %33 : vector<1x1x16x64xf32> to vector<16x64xf32>
    %35 = vector.shape_cast %32 : vector<16x64xf32> to vector<1x1x16x64xf32>
    tpu.vector_store %arg7[%c0_25, %c0_26, %c0_27, %c0_28], %35 {strides = array<i32>} : memref<1x2x16x64xf32, #tpu.memory_space<vmem>>, vector<1x1x16x64xf32>,
    %c0_29 = arith.constant 0 : index
    %c1 = arith.constant 1 : index
    %c0_30 = arith.constant 0 : index
    %c0_31 = arith.constant 0 : index
    %36 = vector.load %arg3[%c0_29, %c1, %c0_30, %c0_31] : memref<1x2x16x64xf32, #tpu.memory_space<vmem>>, vector<1x1x16x64xf32>
    %37 = vector.shape_cast %36 : vector<1x1x16x64xf32> to vector<16x64xf32>
    %cst_32 = arith.constant 0.180336878 : f32
    %38 = vector.broadcast %cst_32 : f32 to vector<16x64xf32>
    %39 = arith.mulf %37, %38 : vector<16x64xf32>
    %c0_33 = arith.constant 0 : index
    %c1_34 = arith.constant 1 : index
    %c0_35 = arith.constant 0 : index
    %c0_36 = arith.constant 0 : index
    %40 = vector.load %arg4[%c0_33, %c1_34, %c0_35, %c0_36] : memref<1x2x16x64xf32, #tpu.memory_space<vmem>>, vector<1x1x16x64xf32>
    %41 = vector.shape_cast %40 : vector<1x1x16x64xf32> to vector<16x64xf32>
    %c0_37 = arith.constant 0 : index
    %c1_38 = arith.constant 1 : index
    %c0_39 = arith.constant 0 : index
    %c0_40 = arith.constant 0 : index
    %42 = vector.load %arg5[%c0_37, %c1_38, %c0_39, %c0_40] : memref<1x2x16x64xf32, #tpu.memory_space<vmem>>, vector<1x1x16x64xf32>
    %43 = vector.shape_cast %42 : vector<1x1x16x64xf32> to vector<16x64xf32>
    %cst_41 = arith.constant dense<0.000000e+00> : vector<16x16xf32>
    %44 = tpu.matmul %39, %41, %cst_41 {dimension_numbers = #tpu.dot_dimension_numbers<[1], [1], [0], [0], [0, 0, 1, 0], [], []>} : vector<16x64xf32>, vector<16x64xf32>, vector<16x16xf32> -> vector<16x16xf32>
    %c0_42 = arith.constant 0 : index
    %c0_43 = arith.constant 0 : index
    %c0_44 = arith.constant 0 : index
    %c0_45 = arith.constant 0 : index
    %45 = vector.load %arg6[%c0_42, %c0_43, %c0_44, %c0_45] : memref<1x1x16x16xi8, #tpu.memory_space<vmem>>, vector<1x1x16x16xi8>
    %46 = vector.shape_cast %45 : vector<1x1x16x16xi8> to vector<16x16xi8>
    %c0_i8_46 = arith.constant 0 : i8
    %47 = vector.broadcast %c0_i8_46 : i8 to vector<16x16xi8>
    %48 = arith.cmpi ne, %46, %47 : vector<16x16xi8>
    %cst_47 = arith.constant -1.000000e+09 : f32
    %49 = vector.broadcast %cst_47 : f32 to vector<16x16xf32>
    %50 = arith.select %48, %49, %44 : vector<16x16xi1>, vector<16x16xf32>
    %cst_48 = arith.constant dense<0xFF800000> : vector<16xf32>
    %51 = vector.multi_reduction <maximumf>, %50, %cst_48 [1] : vector<16x16xf32> to vector<16xf32>
    %52 = vector.shape_cast %51 : vector<16xf32> to vector<16x1xf32>
    %53 = vector.broadcast %52 : vector<16x1xf32> to vector<16x16xf32>
    %54 = arith.subf %50, %53 : vector<16x16xf32>
    %55 = math.exp2 %54 : vector<16x16xf32>
    %cst_49 = arith.constant dense<0.000000e+00> : vector<16xf32>
    %56 = vector.multi_reduction <add>, %55, %cst_49 [1] : vector<16x16xf32> to vector<16xf32>
    %57 = vector.shape_cast %56 : vector<16xf32> to vector<16x1xf32>
    %58 = tpu.reciprocal %57 {approx = true} : vector<16x1xf32> -> vector<16x1xf32>
    %59 = arith.mulf %57, %58 : vector<16x1xf32>
    %cst_50 = arith.constant 2.000000e+00 : f32
    %60 = vector.broadcast %cst_50 : f32 to vector<16x1xf32>
    %61 = arith.subf %60, %59 : vector<16x1xf32>
    %62 = arith.mulf %58, %61 : vector<16x1xf32>
    %63 = vector.broadcast %62 : vector<16x1xf32> to vector<16x16xf32>
    %64 = arith.mulf %55, %63 : vector<16x16xf32>
    %c0_51 = arith.constant 0 : index
    %c1_52 = arith.constant 1 : index
    %c0_53 = arith.constant 0 : index
    %c0_54 = arith.constant 0 : index
    %65 = vector.load %arg8[%c0_51, %c1_52, %c0_53, %c0_54] : memref<1x2x16x16xf32, #tpu.memory_space<vmem>>, vector<1x1x16x16xf32>
    %66 = vector.shape_cast %65 : vector<1x1x16x16xf32> to vector<16x16xf32>
    %67 = vector.shape_cast %64 : vector<16x16xf32> to vector<1x1x16x16xf32>
    tpu.vector_store %arg8[%c0_51, %c1_52, %c0_53, %c0_54], %67 {strides = array<i32>} : memref<1x2x16x16xf32, #tpu.memory_space<vmem>>, vector<1x1x16x16xf32>,
    %cst_55 = arith.constant dense<0.000000e+00> : vector<16x64xf32>
    %68 = tpu.matmul %64, %43, %cst_55 {dimension_numbers = #tpu.dot_dimension_numbers<[1], [0], [0], [1], [0, 0, 1, 1], [], []>} : vector<16x16xf32>, vector<16x64xf32>, vector<16x64xf32> -> vector<16x64xf32>
    %c0_56 = arith.constant 0 : index
    %c1_57 = arith.constant 1 : index
    %c0_58 = arith.constant 0 : index
    %c0_59 = arith.constant 0 : index
    %69 = vector.load %arg7[%c0_56, %c1_57, %c0_58, %c0_59] : memref<1x2x16x64xf32, #tpu.memory_space<vmem>>, vector<1x1x16x64xf32>
    %70 = vector.shape_cast %69 : vector<1x1x16x64xf32> to vector<16x64xf32>
    %71 = vector.shape_cast %68 : vector<16x64xf32> to vector<1x1x16x64xf32>
    tpu.vector_store %arg7[%c0_56, %c1_57, %c0_58, %c0_59], %71 {strides = array<i32>} : memref<1x2x16x64xf32, #tpu.memory_space<vmem>>, vector<1x1x16x64xf32>,
    return
  }
  func.func @transform_0(%arg0: i32, %arg1: i32, %arg2: i32) -> (i32, i32, i32, i32) {
    %c0_i32 = arith.constant 0 : i32
    %c0_i32_0 = arith.constant 0 : i32
    return %arg0, %arg1, %arg2, %c0_i32 : i32, i32, i32, i32
  }
  func.func @transform_1(%arg0: i32, %arg1: i32, %arg2: i32) -> (i32, i32, i32, i32) {
    %c0_i32 = arith.constant 0 : i32
    %c0_i32_0 = arith.constant 0 : i32
    %c0_i32_1 = arith.constant 0 : i32
    return %arg0, %arg1, %c0_i32, %c0_i32_0 : i32, i32, i32, i32
  }
  func.func @transform_2(%arg0: i32, %arg1: i32, %arg2: i32) -> (i32, i32, i32, i32) {
    %c0_i32 = arith.constant 0 : i32
    %c0_i32_0 = arith.constant 0 : i32
    %c0_i32_1 = arith.constant 0 : i32
    return %arg0, %arg1, %c0_i32, %c0_i32_0 : i32, i32, i32, i32
  }
  func.func @transform_3(%arg0: i32, %arg1: i32, %arg2: i32) -> (i32, i32, i32, i32) {
    %c0_i32 = arith.constant 0 : i32
    %c0_i32_0 = arith.constant 0 : i32
    %c0_i32_1 = arith.constant 0 : i32
    return %arg0, %c0_i32, %arg2, %c0_i32_0 : i32, i32, i32, i32
  }
  func.func @transform_4(%arg0: i32, %arg1: i32, %arg2: i32) -> (i32, i32, i32, i32) {
    %c0_i32 = arith.constant 0 : i32
    %c0_i32_0 = arith.constant 0 : i32
    return %arg0, %arg1, %arg2, %c0_i32 : i32, i32, i32, i32
  }
  func.func @transform_5(%arg0: i32, %arg1: i32, %arg2: i32) -> (i32, i32, i32, i32) {
    %c0_i32 = arith.constant 0 : i32
    %c0_i32_0 = arith.constant 0 : i32
    return %arg0, %arg1, %arg2, %c0_i32 : i32, i32, i32, i32
  }
}

</mosaic_0001>

<llo_original>
// kernel: tpu_custom_call.1
$region0: #{tpu_custom_call.1}
  #allocation0 [shape = 'u32[]', space=smem, size = 0x4, offset = 0x4, fixed_abs, tag = 'smem constant byte address 0x4 - core index']
  #allocation1 [shape = 'u32[144,128]{1,0:T(1,128)}', space=vmem, size = 0x12000, scoped, tag = 'internal scratch']
  %s0 = inlined_call_operand.hbm [shape: f32[2,8,16,64], index: 0, kind: input, shape index: {}]
  %s1 = inlined_call_operand.hbm [shape: f32[2,8,16,64], index: 1, kind: input, shape index: {}]
  %s2 = inlined_call_operand.hbm [shape: f32[2,8,16,64], index: 2, kind: input, shape index: {}]
  %s3 = inlined_call_operand.vmem [shape: s8[2,1,16,16], index: 3, kind: input, shape index: {}]
  %s4 = inlined_call_operand.hbm [shape: f32[2,8,16,64], index: 4, kind: output, shape index: {0}]
  %s5 = inlined_call_operand.hbm [shape: f32[2,8,16,16], index: 5, kind: output, shape index: {1}]
  %6 = xla_tuple %s4, %s5
  %s7 = sld [smem:[#allocation0]]
  $region69: #{tpu_custom_call.1} parent=0
    _
  %s9 = ssub.s32 1, %s7
  %s10 = scalar_select 0, %s9, %s7
  $region1: #{tpu_custom_call.1} parent=0
    #allocation2 [shape = 'u8[32768]{0}', space=vmem, size = 0x8000, scoped, tag = 'input window, operand 0']
    #allocation3 [shape = 's32[2]{0}', space=sflag, size = 0x8, scoped, tag = 'scoped memory for tpu_custom_call.1']
    #allocation4 [shape = 's32[2]{0}', space=sflag, size = 0x8, scoped, tag = 'scoped memory for tpu_custom_call.1']
    #allocation5 [shape = 'u8[32768]{0}', space=vmem, size = 0x8000, scoped, tag = 'input window, operand 1']
    #allocation6 [shape = 's32[2]{0}', space=sflag, size = 0x8, scoped, tag = 'scoped memory for tpu_custom_call.1']
    #allocation7 [shape = 'u8[32768]{0}', space=vmem, size = 0x8000, scoped, tag = 'input window, operand 2']
    #allocation8 [shape = 'u8[32768]{0}', space=vmem, size = 0x8000, scoped, tag = 'output window, operand 0']
    #allocation9 [shape = 'u8[32768]{0}', space=vmem, size = 0x8000, scoped, tag = 'output window, operand 1']
    #allocation10 [shape = 's32[2]{0}', space=sflag, size = 0x8, scoped, tag = 'scoped memory for tpu_custom_call.1']
    %11 = vsyncpa [#allocation3], 0
    %s12 = scalar_lea.sflag [#allocation3], 1
    %13 = vsyncpa %s12, 0
    %14 = vsyncpa [#allocation6], 0
    %s15 = scalar_lea.sflag [#allocation6], 1
    %16 = vsyncpa %s15, 0
    %17 = vsyncpa [#allocation4], 0
    %s18 = scalar_lea.sflag [#allocation4], 1
    %19 = vsyncpa %s18, 0
    %20 = vsyncpa [#allocation10], 0
    %s21 = scalar_lea.sflag [#allocation10], 1
    %22 = vsyncpa %s21, 0
    loop: start=0, step=1, limit=10
    $region2: #{tpu_custom_call.1} parent=1 // loop_pre_header
      _
    $region3: #{tpu_custom_call.1} parent=1 // loop_header
      %s24 = sphi 0, %s28
      %p25 = scmp.ge.s32.totalorder %s24, 10
      %s31 = sphi 0, %s50
      %s32 = sphi 0, %s46
      %s33 = sphi 0, %s42
      %s34 = sphi 0, %s31
      %s35 = sphi 0, %s32
      %s36 = sphi 0, %s33
      %s37 = sphi 0, %s34
      %s38 = sphi 0, %s35
      %s39 = sphi 0, %s36
      %s57 = sphi 0, %s59
      %s60 = sphi 0, %s57
      %s61 = sphi 0, %s60
      %s77 = sphi 0, %s61
      %s85 = sphi 0, %s87
      %s88 = sphi 0, %s85
      %s89 = sphi 0, %s88
      %s105 = sphi 0, %s89
      %s113 = sphi 0, %s115
      %s116 = sphi 0, %s113
      %s117 = sphi 0, %s116
      %s133 = sphi 0, %s117
      %s141 = sphi 0, %s143
      %s144 = sphi 0, %s141
      %s145 = sphi 0, %s144
      %s161 = sphi 0, %s145
      %s171 = sphi 0, %s173
      %s174 = sphi 0, %s171
      %s175 = sphi 0, %s174
      %s191 = sphi 0, %s175
      %s201 = sphi 0, %s203
      %s204 = sphi 0, %s201
      %s205 = sphi 0, %s204
      %s221 = sphi 0, %s205
    $region4: #{tpu_custom_call.1} parent=1 // loop_header_branch
      %27 = sbr.rel (%p25) target = $region8
    $region5: #{tpu_custom_call.1} parent=1 // loop_body
      %s29 = ssub.s32 %s24, 1
      %s30 = ssub.s32 %s24, 2
      %s40 = sadd.s32 1, %s33
      %p41 = scmp.ge.s32.totalorder %s40, 1
      %s42 = scalar_select %p41, 0, %s40
      %s43 = sadd.s32 1, %s32
      %s44 = scalar_select %p41, %s43, %s32
      %p45 = scmp.ge.s32.totalorder %s44, 4
      %s46 = scalar_select %p45, 0, %s44
      %s47 = sadd.s32 1, %s31
      %s48 = scalar_select %p45, %s47, %s31
      %p49 = scmp.ge.s32.totalorder %s48, 2
      %s50 = scalar_select %p49, 0, %s48
      %s51 = ssub.s32 %s31, %s50
      %s52 = ssub.s32 %s32, %s46
      %s53 = sor.u32 %s51, %s52
      %s54 = ssub.s32 %s33, %s42
      %s55 = sor.u32 %s53, %s54
      %p56 = scmp.eq.s32.totalorder %s55, 0
      %s58 = sadd.s32 %s57, 1
      %s59 = scalar_select %p56, %s57, %s58
      %p62 = pneg %p56
      %p63 = scmp.eq.s32.totalorder %s24, 7
      %p64 = por %p62, %p63
      %p65 = scmp.ne.s32.totalorder %s57, %s60
      %p66 = scmp.eq.s32.totalorder %s24, 0
      %p67 = por %p65, %p66
      %p68 = scmp.ne.s32.totalorder %s57, %s60
      %p69 = scmp.eq.s32.totalorder %s29, 7
      %p70 = por %p68, %p69
      %p71 = scmp.ne.s32.totalorder %s60, %s61
      %p72 = scmp.eq.s32.totalorder %s29, 0
      %p73 = por %p71, %p72
      %p74 = scmp.ne.s32.totalorder %s60, %s61
      %p75 = scmp.eq.s32.totalorder %s30, 7
      %p76 = por %p74, %p75
      %p78 = scmp.ne.s32.totalorder %s61, %s77
      %p79 = scmp.eq.s32.totalorder %s30, 0
      %p80 = por %p78, %p79
      %s81 = ssub.s32 %s31, %s50
      %s82 = ssub.s32 %s32, %s46
      %s83 = sor.u32 %s81, %s82
      %p84 = scmp.eq.s32.totalorder %s83, 0
      %s86 = sadd.s32 %s85, 1
      %s87 = scalar_select %p84, %s85, %s86
      %p90 = pneg %p84
      %p91 = scmp.eq.s32.totalorder %s24, 7
      %p92 = por %p90, %p91
      %p93 = scmp.ne.s32.totalorder %s85, %s88
      %p94 = scmp.eq.s32.totalorder %s24, 0
      %p95 = por %p93, %p94
      %p96 = scmp.ne.s32.totalorder %s85, %s88
      %p97 = scmp.eq.s32.totalorder %s29, 7
      %p98 = por %p96, %p97
      %p99 = scmp.ne.s32.totalorder %s88, %s89
      %p100 = scmp.eq.s32.totalorder %s29, 0
      %p101 = por %p99, %p100
      %p102 = scmp.ne.s32.totalorder %s88, %s89
      %p103 = scmp.eq.s32.totalorder %s30, 7
      %p104 = por %p102, %p103
      %p106 = scmp.ne.s32.totalorder %s89, %s105
      %p107 = scmp.eq.s32.totalorder %s30, 0
      %p108 = por %p106, %p107
      %s109 = ssub.s32 %s31, %s50
      %s110 = ssub.s32 %s32, %s46
      %s111 = sor.u32 %s109, %s110
      %p112 = scmp.eq.s32.totalorder %s111, 0
      %s114 = sadd.s32 %s113, 1
      %s115 = scalar_select %p112, %s113, %s114
      %p118 = pneg %p112
      %p119 = scmp.eq.s32.totalorder %s24, 7
      %p120 = por %p118, %p119
      %p121 = scmp.ne.s32.totalorder %s113, %s116
      %p122 = scmp.eq.s32.totalorder %s24, 0
      %p123 = por %p121, %p122
      %p124 = scmp.ne.s32.totalorder %s113, %s116
      %p125 = scmp.eq.s32.totalorder %s29, 7
      %p126 = por %p124, %p125
      %p127 = scmp.ne.s32.totalorder %s116, %s117
      %p128 = scmp.eq.s32.totalorder %s29, 0
      %p129 = por %p127, %p128
      %p130 = scmp.ne.s32.totalorder %s116, %s117
      %p131 = scmp.eq.s32.totalorder %s30, 7
      %p132 = por %p130, %p131
      %p134 = scmp.ne.s32.totalorder %s117, %s133
      %p135 = scmp.eq.s32.totalorder %s30, 0
      %p136 = por %p134, %p135
      %s137 = ssub.s32 %s31, %s50
      %s138 = ssub.s32 %s33, %s42
      %s139 = sor.u32 %s137, %s138
      %p140 = scmp.eq.s32.totalorder %s139, 0
      %s142 = sadd.s32 %s141, 1
      %s143 = scalar_select %p140, %s141, %s142
      %p146 = pneg %p140
      %p147 = scmp.eq.s32.totalorder %s24, 7
      %p148 = por %p146, %p147
      %p149 = scmp.ne.s32.totalorder %s141, %s144
      %p150 = scmp.eq.s32.totalorder %s24, 0
      %p151 = por %p149, %p150
      %p152 = scmp.ne.s32.totalorder %s141, %s144
      %p153 = scmp.eq.s32.totalorder %s29, 7
      %p154 = por %p152, %p153
      %p155 = scmp.ne.s32.totalorder %s144, %s145
      %p156 = scmp.eq.s32.totalorder %s29, 0
      %p157 = por %p155, %p156
      %p158 = scmp.ne.s32.totalorder %s144, %s145
      %p159 = scmp.eq.s32.totalorder %s30, 7
      %p160 = por %p158, %p159
      %p162 = scmp.ne.s32.totalorder %s145, %s161
      %p163 = scmp.eq.s32.totalorder %s30, 0
      %p164 = por %p162, %p163
      %s165 = ssub.s32 %s31, %s50
      %s166 = ssub.s32 %s32, %s46
      %s167 = sor.u32 %s165, %s166
      %s168 = ssub.s32 %s33, %s42
      %s169 = sor.u32 %s167, %s168
      %p170 = scmp.eq.s32.totalorder %s169, 0
      %s172 = sadd.s32 %s171, 1
      %s173 = scalar_select %p170, %s171, %s172
      %p176 = pneg %p170
      %p177 = scmp.eq.s32.totalorder %s24, 7
      %p178 = por %p176, %p177
      %p179 = scmp.ne.s32.totalorder %s171, %s174
      %p180 = scmp.eq.s32.totalorder %s24, 0
      %p181 = por %p179, %p180
      %p182 = scmp.ne.s32.totalorder %s171, %s174
      %p183 = scmp.eq.s32.totalorder %s29, 7
      %p184 = por %p182, %p183
      %p185 = scmp.ne.s32.totalorder %s174, %s175
      %p186 = scmp.eq.s32.totalorder %s29, 0
      %p187 = por %p185, %p186
      %p188 = scmp.ne.s32.totalorder %s174, %s175
      %p189 = scmp.eq.s32.totalorder %s30, 7
      %p190 = por %p188, %p189
      %p192 = scmp.ne.s32.totalorder %s175, %s191
      %p193 = scmp.eq.s32.totalorder %s30, 0
      %p194 = por %p192, %p193
      %s195 = ssub.s32 %s31, %s50
      %s196 = ssub.s32 %s32, %s46
      %s197 = sor.u32 %s195, %s196
      %s198 = ssub.s32 %s33, %s42
      %s199 = sor.u32 %s197, %s198
      %p200 = scmp.eq.s32.totalorder %s199, 0
      %s202 = sadd.s32 %s201, 1
      %s203 = scalar_select %p200, %s201, %s202
      %p206 = pneg %p200
      %p207 = scmp.eq.s32.totalorder %s24, 7
      %p208 = por %p206, %p207
      %p209 = scmp.ne.s32.totalorder %s201, %s204
      %p210 = scmp.eq.s32.totalorder %s24, 0
      %p211 = por %p209, %p210
      %p212 = scmp.ne.s32.totalorder %s201, %s204
      %p213 = scmp.eq.s32.totalorder %s29, 7
      %p214 = por %p212, %p213
      %p215 = scmp.ne.s32.totalorder %s204, %s205
      %p216 = scmp.eq.s32.totalorder %s29, 0
      %p217 = por %p215, %p216
      %p218 = scmp.ne.s32.totalorder %s204, %s205
      %p219 = scmp.eq.s32.totalorder %s30, 7
      %p220 = por %p218, %p219
      %p222 = scmp.ne.s32.totalorder %s205, %s221
      %p223 = scmp.eq.s32.totalorder %s30, 0
      %p224 = por %p222, %p223
      %p225 = scmp.le.s32.totalorder 1, %s24
      %p226 = scmp.lt.s32.totalorder %s24, 9
      %p227 = pnand %p225, %p226
      %p228 = pneg %p227
      // Predicated region
      $region9: #{tpu_custom_call.1} parent=5 // pred_check
        _
      $region10: #{tpu_custom_call.1} parent=5 // pred_check_branch
        %230 = sbr.rel (%p227) target = $region12
      $region11: #{tpu_custom_call.1} parent=5 // pred_region
        %s231 = ssub.s32 %s24, 1
      $region12: #{tpu_custom_call.1} parent=5 // pred_fallthru
        _
      %p232 = scmp.lt.s32.totalorder %s24, 8
      // Predicated region
      $region13: #{tpu_custom_call.1} parent=5 // pred_check
        %p233 = pneg %p232
      $region14: #{tpu_custom_call.1} parent=5 // pred_check_branch
        %235 = sbr.rel (%p233) target = $region16
      $region15: #{tpu_custom_call.1} parent=5 // pred_region
        // Predicated region
        $region17: #{tpu_custom_call.1} parent=15 // pred_check
          %p236 = pneg %p67
        $region18: #{tpu_custom_call.1} parent=15 // pred_check_branch
          %238 = sbr.rel (%p236) target = $region20
        $region19: #{tpu_custom_call.1} parent=15 // pred_region
          %s239 = sand.u32 %s57, 1
          %s240 = scalar_lea.sflag [#allocation3], %s239
          %s241 = sand.u32 %s57, 1
          %s242 = smul.addr %s241, 32
          %s243 = scalar_lea.vmem [#allocation2], %s242
          %s244 = smul.u32 2, %s32
          %s245 = smul.u32 2, %s33
          %s247 = ssub.s32 512, 512
          %248 = vsyncadd %s240, %s247
          %s249 = smul.addr %s244, 2
          %s250 = sadd.s32 %s245, %s249
          %s251 = smul.addr %s31, 16
          %s252 = sadd.s32 %s250, %s251
          %s253 = smul.addr %s252, 128
          %s254 = scalar_lea.hbm %s0, %s253
          %s255 = sshll.u32 %s243, 4
          %s256 = int_to_ptr.vmem [resolvable:$true] %s255
          %261 = dma.hbm_to_vmem [thread:$0]  %s254, 512, %s256, %s240, 128, 128, 8
        $region20: #{tpu_custom_call.1} parent=15 // pred_fallthru
          _
        // Predicated region
        $region21: #{tpu_custom_call.1} parent=15 // pred_check
          %p262 = pneg %p95
        $region22: #{tpu_custom_call.1} parent=15 // pred_check_branch
          %264 = sbr.rel (%p262) target = $region24
        $region23: #{tpu_custom_call.1} parent=15 // pred_region
          %s265 = sand.u32 %s24, 1
          %s266 = scalar_lea.sflag [#allocation6], %s265
          %s267 = sand.u32 %s85, 1
          %s268 = smul.addr %s267, 32
          %s269 = scalar_lea.vmem [#allocation5], %s268
          %s270 = smul.u32 2, %s32
          %s272 = ssub.s32 512, 512
          %273 = vsyncadd %s266, %s272
          %s274 = smul.addr %s270, 2
          %s275 = smul.addr %s31, 16
          %s276 = sadd.s32 %s274, %s275
          %s277 = smul.addr %s276, 128
          %s278 = scalar_lea.hbm %s1, %s277
          %s279 = sshll.u32 %s269, 4
          %s280 = int_to_ptr.vmem [resolvable:$true] %s279
          %285 = dma.hbm_to_vmem [thread:$0]  %s278, 512, %s280, %s266, 128, 128, 8
        $region24: #{tpu_custom_call.1} parent=15 // pred_fallthru
          _
        // Predicated region
        $region25: #{tpu_custom_call.1} parent=15 // pred_check
          %p286 = pneg %p123
        $region26: #{tpu_custom_call.1} parent=15 // pred_check_branch
          %288 = sbr.rel (%p286) target = $region28
        $region27: #{tpu_custom_call.1} parent=15 // pred_region
          %s289 = sand.u32 %s24, 1
          %s290 = scalar_lea.sflag [#allocation6], %s289
          %s291 = sand.u32 %s113, 1
          %s292 = smul.addr %s291, 32
          %s293 = scalar_lea.vmem [#allocation7], %s292
          %s294 = smul.u32 2, %s32
          %s296 = ssub.s32 512, 512
          %297 = vsyncadd %s290, %s296
          %s298 = smul.addr %s294, 2
          %s299 = smul.addr %s31, 16
          %s300 = sadd.s32 %s298, %s299
          %s301 = smul.addr %s300, 128
          %s302 = scalar_lea.hbm %s2, %s301
          %s303 = sshll.u32 %s293, 4
          %s304 = int_to_ptr.vmem [resolvable:$true] %s303
          %309 = dma.hbm_to_vmem [thread:$0]  %s302, 512, %s304, %s290, 128, 128, 8
        $region28: #{tpu_custom_call.1} parent=15 // pred_fallthru
          _
        // Predicated region
        $region29: #{tpu_custom_call.1} parent=15 // pred_check
          %p310 = pneg %p151
        $region30: #{tpu_custom_call.1} parent=15 // pred_check_branch
          %312 = sbr.rel (%p310) target = $region32
        $region31: #{tpu_custom_call.1} parent=15 // pred_region
          %s313 = smul.u32 2, %s33
          %p314 = scmp.lt.s32.totalorder %s31, 1
          %s315 = scalar_select %p314, %s31, 1
          %p316 = scmp.lt.s32.totalorder %s313, 1
          %s317 = scalar_select %p316, %s313, 1
          %s318 = smul.addr %s315, 2
          %s319 = sadd.s32 %s317, %s318
          %s320 = smul.addr %s319, 2
          %s321 = scalar_lea.vmem %s3, %s320
          %s322 = smul.u32 2, %s33
        $region32: #{tpu_custom_call.1} parent=15 // pred_fallthru
          _
      $region16: #{tpu_custom_call.1} parent=5 // pred_fallthru
        _
      %p323 = scmp.le.s32.totalorder 1, %s24
      %p324 = scmp.lt.s32.totalorder %s24, 9
      %p325 = pnand %p323, %p324
      %p326 = pneg %p325
      // Predicated region
      $region33: #{tpu_custom_call.1} parent=5 // pred_check
        _
      $region34: #{tpu_custom_call.1} parent=5 // pred_check_branch
        %328 = sbr.rel (%p325) target = $region36
      $region35: #{tpu_custom_call.1} parent=5 // pred_region
        %s329 = ssub.s32 %s24, 1
        %s330 = sand.u32 %s60, 1
        %s331 = scalar_lea.sflag [#allocation3], %s330
        %s332 = sand.u32 %s60, 1
        %s333 = smul.addr %s332, 32
        %s334 = scalar_lea.vmem [#allocation2], %s333
        // Predicated region
        $region37: #{tpu_custom_call.1} parent=35 // pred_check
          %p335 = pneg %p73
        $region38: #{tpu_custom_call.1} parent=35 // pred_check_branch
          %337 = sbr.rel (%p335) target = $region40
        $region39: #{tpu_custom_call.1} parent=35 // pred_region
          %338 = dma.done %s331, 512
        $region40: #{tpu_custom_call.1} parent=35 // pred_fallthru
          _
        %s339 = sand.u32 %s29, 1
        %s340 = scalar_lea.sflag [#allocation6], %s339
        %s341 = sand.u32 %s88, 1
        %s342 = smul.addr %s341, 32
        %s343 = scalar_lea.vmem [#allocation5], %s342
        // Predicated region
        $region41: #{tpu_custom_call.1} parent=35 // pred_check
          %p344 = pneg %p101
        $region42: #{tpu_custom_call.1} parent=35 // pred_check_branch
          %346 = sbr.rel (%p344) target = $region44
        $region43: #{tpu_custom_call.1} parent=35 // pred_region
          %347 = dma.done %s340, 512
        $region44: #{tpu_custom_call.1} parent=35 // pred_fallthru
          _
        %s348 = sand.u32 %s29, 1
        %s349 = scalar_lea.sflag [#allocation6], %s348
        %s350 = sand.u32 %s116, 1
        %s351 = smul.addr %s350, 32
        %s352 = scalar_lea.vmem [#allocation7], %s351
        // Predicated region
        $region45: #{tpu_custom_call.1} parent=35 // pred_check
          %p353 = pneg %p129
        $region46: #{tpu_custom_call.1} parent=35 // pred_check_branch
          %355 = sbr.rel (%p353) target = $region48
        $region47: #{tpu_custom_call.1} parent=35 // pred_region
          %356 = dma.done %s349, 512
        $region48: #{tpu_custom_call.1} parent=35 // pred_fallthru
          _
        %s357 = sand.u32 %s60, 1
        %s358 = scalar_lea.sflag [#allocation3], %s357
        %s359 = sand.u32 %s60, 1
        %s360 = smul.addr %s359, 32
        %s361 = scalar_lea.vmem [#allocation2], %s360
        %p362 = pneg %p73
        %p363 = pneg %p70
        %s364 = sand.u32 %s29, 1
        %s365 = scalar_lea.sflag [#allocation6], %s364
        %s366 = sand.u32 %s88, 1
        %s367 = smul.addr %s366, 32
        %s368 = scalar_lea.vmem [#allocation5], %s367
        %p369 = pneg %p101
        %p370 = pneg %p98
        %s371 = sand.u32 %s29, 1
        %s372 = scalar_lea.sflag [#allocation6], %s371
        %s373 = sand.u32 %s116, 1
        %s374 = smul.addr %s373, 32
        %s375 = scalar_lea.vmem [#allocation7], %s374
        %p376 = pneg %p129
        %p377 = pneg %p126
        %s378 = smul.u32 2, %s36
        %p379 = scmp.lt.s32.totalorder %s34, 1
        %s380 = scalar_select %p379, %s34, 1
        %p381 = scmp.lt.s32.totalorder %s378, 1
        %s382 = scalar_select %p381, %s378, 1
        %s383 = smul.addr %s380, 2
        %s384 = sadd.s32 %s382, %s383
        %s385 = smul.addr %s384, 2
        %s386 = scalar_lea.vmem %s3, %s385
        %p387 = pneg %p157
        %p388 = pneg %p154
        %p389 = pneg %p187
        %p390 = pneg %p184
        %s391 = sand.u32 %s174, 1
        %s392 = scalar_lea.sflag [#allocation4], %s391
        %s393 = sand.u32 %s174, 1
        %s394 = smul.addr %s393, 32
        %s395 = scalar_lea.vmem [#allocation8], %s394
        %p396 = pneg %p217
        %p397 = pneg %p214
        %s398 = sand.u32 %s204, 1
        %s399 = scalar_lea.sflag [#allocation10], %s398
        %s400 = sand.u32 %s204, 1
        %s401 = smul.addr %s400, 32
        %s402 = scalar_lea.vmem [#allocation9], %s401
        %s403 = smul.u32 2, %s35
        %s404 = smul.u32 2, %s36
        %s405 = smul.u32 2, %s35
        %s406 = smul.u32 2, %s35
        %s407 = smul.u32 2, %s36
        %p408 = scmp.lt.s32.totalorder %s34, 1
        %s409 = scalar_select %p408, %s34, 1
        %p410 = scmp.lt.s32.totalorder %s407, 1
        %s411 = scalar_select %p410, %s407, 1
        %s412 = smul.addr %s409, 2
        %s413 = sadd.s32 %s411, %s412
        %s414 = smul.addr %s413, 2
        %s415 = scalar_lea.vmem %s3, %s414
        %s416 = smul.u32 2, %s36
        %s417 = smul.u32 2, %s35
        %s418 = smul.u32 2, %s36
        %s419 = smul.u32 2, %s35
        %s420 = smul.u32 2, %s36
        %v423 = vld [vmem:[%s334] sm:$0xff]
        %v424 = vld [vmem:[%s334 + $0x8] sm:$0xff]
        %v425 = vmul.f32 %v423, 0.18033688
        %v426 = vmul.f32 %v424, 0.18033688
        %v427 = vld [vmem:[%s343] sm:$0xff]
        %v428 = vld [vmem:[%s343 + $0x8] sm:$0xff]
        %v429 = vld [vmem:[%s352] sm:$0xff]
        %v430 = vld [vmem:[%s352 + $0x8] sm:$0xff]
        %vm431 = vcmask 523264
        %v433 = vsel %vm431, %v425, 0
        %v436 = vsel %vm431, %v426, 0
        %v439 = vsel %vm431, %v427, 0
        %v442 = vsel %vm431, %v428, 0
        %444 = vmatprep.subr.mxu0 0.0
        %445 = vmatpush1.xpose.msra.mxu0 %v439
        %446 = vmatprep.subr.mxu0 0.0
        %447 = vmatpush1.xpose.msra.mxu0 %v442
        %448 = vmatprep.subr.mxu0 0.0
        %449 = vmatpush1.xpose.msra.mxu0 0.0
        %450 = vmatprep.subr.mxu0 0.0
        %451 = vmatpush1.xpose.msra.mxu0 0.0
        %452 = vmatprep.subr.mxu0 0.0
        %453 = vmatpush1.xpose.msra.mxu0 0.0
        %454 = vmatprep.subr.mxu0 0.0
        %455 = vmatpush1.xpose.msra.mxu0 0.0
        %456 = vmatprep.subr.mxu0 0.0
        %457 = vmatpush1.xpose.msra.mxu0 0.0
        %458 = vmatprep.subr.mxu0 0.0
        %459 = vmatpush1.xpose.msra.mxu0 0.0
        %460 = vmatprep.subr.mxu0 0.0
        %461 = vmatpush1.xpose.msra.mxu0 0.0
        %462 = vmatprep.subr.mxu0 0.0
        %463 = vmatpush1.xpose.msra.mxu0 0.0
        %464 = vmatprep.subr.mxu0 0.0
        %465 = vmatpush1.xpose.msra.mxu0 0.0
        %466 = vmatprep.subr.mxu0 0.0
        %467 = vmatpush1.xpose.msra.mxu0 0.0
        %468 = vmatprep.subr.mxu0 0.0
        %469 = vmatpush1.xpose.msra.mxu0 0.0
        %470 = vmatprep.subr.mxu0 0.0
        %471 = vmatpush1.xpose.msra.mxu0 0.0
        %472 = vmatprep.subr.mxu0 0.0
        %473 = vmatpush1.xpose.msra.mxu0 0.0
        %474 = vmatprep.subr.mxu0 0.0
        %475 = vmatpush1.xpose.msra.mxu0 0.0
        %476 = vmatprep.subr.mxu0 0.0
        %477 = vmatpush1.xpose.msra.mxu0 0.0
        %478 = vmatprep.subr.mxu0 0.0
        %479 = vmatpush1.xpose.msra.mxu0 0.0
        %480 = vmatprep.subr.mxu0 0.0
        %481 = vmatpush1.xpose.msra.mxu0 0.0
        %482 = vmatprep.subr.mxu0 0.0
        %483 = vmatpush1.xpose.msra.mxu0 0.0
        %484 = vmatprep.subr.mxu0 0.0
        %485 = vmatpush1.xpose.msra.mxu0 0.0
        %486 = vmatprep.subr.mxu0 0.0
        %487 = vmatpush1.xpose.msra.mxu0 0.0
        %488 = vmatprep.subr.mxu0 0.0
        %489 = vmatpush1.xpose.msra.mxu0 0.0
        %490 = vmatprep.subr.mxu0 0.0
        %491 = vmatpush1.xpose.msra.mxu0 0.0
        %492 = vmatprep.subr.mxu0 0.0
        %493 = vmatpush1.xpose.msra.mxu0 0.0
        %494 = vmatprep.subr.mxu0 0.0
        %495 = vmatpush1.xpose.msra.mxu0 0.0
        %496 = vmatprep.subr.mxu0 0.0
        %497 = vmatpush1.xpose.msra.mxu0 0.0
        %498 = vmatprep.subr.mxu0 0.0
        %499 = vmatpush1.xpose.msra.mxu0 0.0
        %500 = vmatprep.subr.mxu0 0.0
        %501 = vmatpush1.xpose.msra.mxu0 0.0
        %502 = vmatprep.subr.mxu0 0.0
        %503 = vmatpush1.xpose.msra.mxu0 0.0
        %504 = vmatprep.subr.mxu0 0.0
        %505 = vmatpush1.xpose.msra.mxu0 0.0
        %506 = vmatprep.subr.mxu0 0.0
        %507 = vmatpush1.xpose.msra.mxu0 0.0
        %508 = vmatprep.mubr.f32.mxu0 0.0
        %509 = vmatmul.mubr.f32.gmra.mrb[0].mxu0 %v433
        %v510 = vpop.f32.mrb[0].mxu0
        %v511 = vadd.f32 0.0, %v510
        %v512 = vpop.f32.mrb[0].mxu0
        %513 = vmatprep.mubr.f32.mxu0 0.0
        %514 = vmatmul.mubr.f32.gmra.mrb[0].mxu0 %v436
        %v515 = vpop.f32.mrb[0].mxu0
        %v516 = vadd.f32 0.0, %v515
        %v517 = vpop.f32.mrb[0].mxu0
        %518 = vdwg.mxu0
        %v519 = vld [vmem:[%s415] sm:$0x3]
        %v520 = vld [vmem:[%s415 + $0x2] sm:$0x3]
        %vm521 = vnez %v519
        %vm522 = vnez %v520
        %v523 = vsel %vm521, 16843009, 0
        %v524 = vsel %vm522, 16843009, 0
        %v525 = vunpack.c.0.s8 %v523
        %v526 = vunpack.c.0.s8 %v524
        %vm527 = vcmp.ne.s32.totalorder %v525, 0
        %vm528 = vcmp.ne.s32.totalorder %v526, 0
        %v529 = vsel %vm527, -1e+09, %v511
        %v530 = vsel %vm528, -1e+09, %v516
        %vm531 = vcmask 130048
        %v532 = vsel %vm531, %v529, -inf
        %533 = vmax.xlane.f32.xlu0 %v532
        %v534 = vpop.xlane.xlu0 %533
        %v535 = vsel %vm531, %v530, -inf
        %536 = vmax.xlane.f32.xlu0 %v535
        %v537 = vpop.xlane.xlu0 %536
        %v538 = vsub.f32 %v529, %v534
        %v539 = vsub.f32 %v530, %v537
        %v540 = vpow.pop %v538
        %v541 = vpow.pop %v539
        %v542 = vsel %vm531, %v540, 0.0
        %543 = vadd.xlane.f32.xlu0 %v542
        %v544 = vpop.xlane.xlu0 %543
        %v545 = vsel %vm531, %v541, 0.0
        %546 = vadd.xlane.f32.xlu0 %v545
        %v547 = vpop.xlane.xlu0 %546
        %v548 = vrcp.pop %v544
        %v549 = vrcp.pop %v547
        %v550 = vmul.f32 %v544, %v548
        %v551 = vmul.f32 %v547, %v549
        %v552 = vsub.f32 2.0, %v550
        %v553 = vsub.f32 2.0, %v551
        %v554 = vmul.f32 %v548, %v552
        %v555 = vmul.f32 %v549, %v553
        %v556 = vmul.f32 %v540, %v554
        %v557 = vmul.f32 %v541, %v555
        %558 = vst.msk [vmem:[%s402] sm:$0xff] %vm531, %v556
        %559 = vst.msk [vmem:[%s402 + $0x8] sm:$0xff] %vm531, %v557
        %v561 = vsel %vm531, %v556, 0
        %v564 = vsel %vm531, %v557, 0
        %566 = vmatprep.subr.mxu0 0.0
        %567 = vmatpush1.msra.mxu0 %v429
        %568 = vmatprep.subr.mxu0 0.0
        %569 = vmatpush1.msra.mxu0 %v430
        %570 = vmatprep.subr.mxu0 0.0
        %571 = vmatpush1.msra.mxu0 0.0
        %572 = vmatprep.subr.mxu0 0.0
        %573 = vmatpush1.msra.mxu0 0.0
        %574 = vmatprep.subr.mxu0 0.0
        %575 = vmatpush1.msra.mxu0 0.0
        %576 = vmatprep.subr.mxu0 0.0
        %577 = vmatpush1.msra.mxu0 0.0
        %578 = vmatprep.subr.mxu0 0.0
        %579 = vmatpush1.msra.mxu0 0.0
        %580 = vmatprep.subr.mxu0 0.0
        %581 = vmatpush1.msra.mxu0 0.0
        %582 = vmatprep.subr.mxu0 0.0
        %583 = vmatpush1.msra.mxu0 0.0
        %584 = vmatprep.subr.mxu0 0.0
        %585 = vmatpush1.msra.mxu0 0.0
        %586 = vmatprep.subr.mxu0 0.0
        %587 = vmatpush1.msra.mxu0 0.0
        %588 = vmatprep.subr.mxu0 0.0
        %589 = vmatpush1.msra.mxu0 0.0
        %590 = vmatprep.subr.mxu0 0.0
        %591 = vmatpush1.msra.mxu0 0.0
        %592 = vmatprep.subr.mxu0 0.0
        %593 = vmatpush1.msra.mxu0 0.0
        %594 = vmatprep.subr.mxu0 0.0
        %595 = vmatpush1.msra.mxu0 0.0
        %596 = vmatprep.subr.mxu0 0.0
        %597 = vmatpush1.msra.mxu0 0.0
        %598 = vmatprep.subr.mxu0 0.0
        %599 = vmatpush1.msra.mxu0 0.0
        %600 = vmatprep.subr.mxu0 0.0
        %601 = vmatpush1.msra.mxu0 0.0
        %602 = vmatprep.subr.mxu0 0.0
        %603 = vmatpush1.msra.mxu0 0.0
        %604 = vmatprep.subr.mxu0 0.0
        %605 = vmatpush1.msra.mxu0 0.0
        %606 = vmatprep.subr.mxu0 0.0
        %607 = vmatpush1.msra.mxu0 0.0
        %608 = vmatprep.subr.mxu0 0.0
        %609 = vmatpush1.msra.mxu0 0.0
        %610 = vmatprep.subr.mxu0 0.0
        %611 = vmatpush1.msra.mxu0 0.0
        %612 = vmatprep.subr.mxu0 0.0
        %613 = vmatpush1.msra.mxu0 0.0
        %614 = vmatprep.subr.mxu0 0.0
        %615 = vmatpush1.msra.mxu0 0.0
        %616 = vmatprep.subr.mxu0 0.0
        %617 = vmatpush1.msra.mxu0 0.0
        %618 = vmatprep.subr.mxu0 0.0
        %619 = vmatpush1.msra.mxu0 0.0
        %620 = vmatprep.subr.mxu0 0.0
        %621 = vmatpush1.msra.mxu0 0.0
        %622 = vmatprep.subr.mxu0 0.0
        %623 = vmatpush1.msra.mxu0 0.0
        %624 = vmatprep.subr.mxu0 0.0
        %625 = vmatpush1.msra.mxu0 0.0
        %626 = vmatprep.subr.mxu0 0.0
        %627 = vmatpush1.msra.mxu0 0.0
        %628 = vmatprep.subr.mxu0 0.0
        %629 = vmatpush1.msra.mxu0 0.0
        %630 = vmatprep.mubr.f32.mxu0 0.0
        %631 = vmatmul.mubr.f32.gmra.mrb[0].mxu0 %v561
        %v632 = vpop.f32.mrb[0].mxu0
        %v633 = vadd.f32 0.0, %v632
        %v634 = vpop.f32.mrb[0].mxu0
        %635 = vmatprep.mubr.f32.mxu0 0.0
        %636 = vmatmul.mubr.f32.gmra.mrb[0].mxu0 %v564
        %v637 = vpop.f32.mrb[0].mxu0
        %v638 = vadd.f32 0.0, %v637
        %v639 = vpop.f32.mrb[0].mxu0
        %640 = vdwg.mxu0
        %641 = vst.msk [vmem:[%s395] sm:$0xff] %vm431, %v633
        %642 = vst.msk [vmem:[%s395 + $0x8] sm:$0xff] %vm431, %v638
        %s643 = scalar_lea.vmem %s334, 16 [#allocation2]
        %v644 = vld [vmem:[%s643] sm:$0xff]
        %v645 = vld [vmem:[%s643 + $0x8] sm:$0xff]
        %v646 = vmul.f32 %v644, 0.18033688
        %v647 = vmul.f32 %v645, 0.18033688
        %s648 = scalar_lea.vmem %s343, 16 [#allocation5]
        %v649 = vld [vmem:[%s648] sm:$0xff]
        %v650 = vld [vmem:[%s648 + $0x8] sm:$0xff]
        %s651 = scalar_lea.vmem %s352, 16 [#allocation7]
        %v652 = vld [vmem:[%s651] sm:$0xff]
        %v653 = vld [vmem:[%s651 + $0x8] sm:$0xff]
        %v655 = vsel %vm431, %v646, 0
        %v658 = vsel %vm431, %v647, 0
        %v661 = vsel %vm431, %v649, 0
        %v664 = vsel %vm431, %v650, 0
        %666 = vmatprep.subr.mxu0 0.0
        %667 = vmatpush1.xpose.msra.mxu0 %v661
        %668 = vmatprep.subr.mxu0 0.0
        %669 = vmatpush1.xpose.msra.mxu0 %v664
        %670 = vmatprep.subr.mxu0 0.0
        %671 = vmatpush1.xpose.msra.mxu0 0.0
        %672 = vmatprep.subr.mxu0 0.0
        %673 = vmatpush1.xpose.msra.mxu0 0.0
        %674 = vmatprep.subr.mxu0 0.0
        %675 = vmatpush1.xpose.msra.mxu0 0.0
        %676 = vmatprep.subr.mxu0 0.0
        %677 = vmatpush1.xpose.msra.mxu0 0.0
        %678 = vmatprep.subr.mxu0 0.0
        %679 = vmatpush1.xpose.msra.mxu0 0.0
        %680 = vmatprep.subr.mxu0 0.0
        %681 = vmatpush1.xpose.msra.mxu0 0.0
        %682 = vmatprep.subr.mxu0 0.0
        %683 = vmatpush1.xpose.msra.mxu0 0.0
        %684 = vmatprep.subr.mxu0 0.0
        %685 = vmatpush1.xpose.msra.mxu0 0.0
        %686 = vmatprep.subr.mxu0 0.0
        %687 = vmatpush1.xpose.msra.mxu0 0.0
        %688 = vmatprep.subr.mxu0 0.0
        %689 = vmatpush1.xpose.msra.mxu0 0.0
        %690 = vmatprep.subr.mxu0 0.0
        %691 = vmatpush1.xpose.msra.mxu0 0.0
        %692 = vmatprep.subr.mxu0 0.0
        %693 = vmatpush1.xpose.msra.mxu0 0.0
        %694 = vmatprep.subr.mxu0 0.0
        %695 = vmatpush1.xpose.msra.mxu0 0.0
        %696 = vmatprep.subr.mxu0 0.0
        %697 = vmatpush1.xpose.msra.mxu0 0.0
        %698 = vmatprep.subr.mxu0 0.0
        %699 = vmatpush1.xpose.msra.mxu0 0.0
        %700 = vmatprep.subr.mxu0 0.0
        %701 = vmatpush1.xpose.msra.mxu0 0.0
        %702 = vmatprep.subr.mxu0 0.0
        %703 = vmatpush1.xpose.msra.mxu0 0.0
        %704 = vmatprep.subr.mxu0 0.0
        %705 = vmatpush1.xpose.msra.mxu0 0.0
        %706 = vmatprep.subr.mxu0 0.0
        %707 = vmatpush1.xpose.msra.mxu0 0.0
        %708 = vmatprep.subr.mxu0 0.0
        %709 = vmatpush1.xpose.msra.mxu0 0.0
        %710 = vmatprep.subr.mxu0 0.0
        %711 = vmatpush1.xpose.msra.mxu0 0.0
        %712 = vmatprep.subr.mxu0 0.0
        %713 = vmatpush1.xpose.msra.mxu0 0.0
        %714 = vmatprep.subr.mxu0 0.0
        %715 = vmatpush1.xpose.msra.mxu0 0.0
        %716 = vmatprep.subr.mxu0 0.0
        %717 = vmatpush1.xpose.msra.mxu0 0.0
        %718 = vmatprep.subr.mxu0 0.0
        %719 = vmatpush1.xpose.msra.mxu0 0.0
        %720 = vmatprep.subr.mxu0 0.0
        %721 = vmatpush1.xpose.msra.mxu0 0.0
        %722 = vmatprep.subr.mxu0 0.0
        %723 = vmatpush1.xpose.msra.mxu0 0.0
        %724 = vmatprep.subr.mxu0 0.0
        %725 = vmatpush1.xpose.msra.mxu0 0.0
        %726 = vmatprep.subr.mxu0 0.0
        %727 = vmatpush1.xpose.msra.mxu0 0.0
        %728 = vmatprep.subr.mxu0 0.0
        %729 = vmatpush1.xpose.msra.mxu0 0.0
        %730 = vmatprep.mubr.f32.mxu0 0.0
        %731 = vmatmul.mubr.f32.gmra.mrb[0].mxu0 %v655
        %v732 = vpop.f32.mrb[0].mxu0
        %v733 = vadd.f32 0.0, %v732
        %v734 = vpop.f32.mrb[0].mxu0
        %735 = vmatprep.mubr.f32.mxu0 0.0
        %736 = vmatmul.mubr.f32.gmra.mrb[0].mxu0 %v658
        %v737 = vpop.f32.mrb[0].mxu0
        %v738 = vadd.f32 0.0, %v737
        %v739 = vpop.f32.mrb[0].mxu0
        %740 = vdwg.mxu0
        %v741 = vld [vmem:[%s415] sm:$0x3]
        %v742 = vld [vmem:[%s415 + $0x2] sm:$0x3]
        %vm743 = vnez %v741
        %vm744 = vnez %v742
        %v745 = vsel %vm743, 16843009, 0
        %v746 = vsel %vm744, 16843009, 0
        %v747 = vunpack.c.0.s8 %v745
        %v748 = vunpack.c.0.s8 %v746
        %vm749 = vcmp.ne.s32.totalorder %v747, 0
        %vm750 = vcmp.ne.s32.totalorder %v748, 0
        %v751 = vsel %vm749, -1e+09, %v733
        %v752 = vsel %vm750, -1e+09, %v738
        %v753 = vsel %vm531, %v751, -inf
        %754 = vmax.xlane.f32.xlu0 %v753
        %v755 = vpop.xlane.xlu0 %754
        %v756 = vsel %vm531, %v752, -inf
        %757 = vmax.xlane.f32.xlu0 %v756
        %v758 = vpop.xlane.xlu0 %757
        %v759 = vsub.f32 %v751, %v755
        %v760 = vsub.f32 %v752, %v758
        %v761 = vpow.pop %v759
        %v762 = vpow.pop %v760
        %v763 = vsel %vm531, %v761, 0.0
        %764 = vadd.xlane.f32.xlu0 %v763
        %v765 = vpop.xlane.xlu0 %764
        %v766 = vsel %vm531, %v762, 0.0
        %767 = vadd.xlane.f32.xlu0 %v766
        %v768 = vpop.xlane.xlu0 %767
        %v769 = vrcp.pop %v765
        %v770 = vrcp.pop %v768
        %v771 = vmul.f32 %v765, %v769
        %v772 = vmul.f32 %v768, %v770
        %v773 = vsub.f32 2.0, %v771
        %v774 = vsub.f32 2.0, %v772
        %v775 = vmul.f32 %v769, %v773
        %v776 = vmul.f32 %v770, %v774
        %v777 = vmul.f32 %v761, %v775
        %v778 = vmul.f32 %v762, %v776
        %s779 = scalar_lea.vmem %s402, 16 [#allocation9]
        %780 = vst.msk [vmem:[%s779] sm:$0xff] %vm531, %v777
        %781 = vst.msk [vmem:[%s779 + $0x8] sm:$0xff] %vm531, %v778
        %v783 = vsel %vm531, %v777, 0
        %v786 = vsel %vm531, %v778, 0
        %788 = vmatprep.subr.mxu0 0.0
        %789 = vmatpush1.msra.mxu0 %v652
        %790 = vmatprep.subr.mxu0 0.0
        %791 = vmatpush1.msra.mxu0 %v653
        %792 = vmatprep.subr.mxu0 0.0
        %793 = vmatpush1.msra.mxu0 0.0
        %794 = vmatprep.subr.mxu0 0.0
        %795 = vmatpush1.msra.mxu0 0.0
        %796 = vmatprep.subr.mxu0 0.0
        %797 = vmatpush1.msra.mxu0 0.0
        %798 = vmatprep.subr.mxu0 0.0
        %799 = vmatpush1.msra.mxu0 0.0
        %800 = vmatprep.subr.mxu0 0.0
        %801 = vmatpush1.msra.mxu0 0.0
        %802 = vmatprep.subr.mxu0 0.0
        %803 = vmatpush1.msra.mxu0 0.0
        %804 = vmatprep.subr.mxu0 0.0
        %805 = vmatpush1.msra.mxu0 0.0
        %806 = vmatprep.subr.mxu0 0.0
        %807 = vmatpush1.msra.mxu0 0.0
        %808 = vmatprep.subr.mxu0 0.0
        %809 = vmatpush1.msra.mxu0 0.0
        %810 = vmatprep.subr.mxu0 0.0
        %811 = vmatpush1.msra.mxu0 0.0
        %812 = vmatprep.subr.mxu0 0.0
        %813 = vmatpush1.msra.mxu0 0.0
        %814 = vmatprep.subr.mxu0 0.0
        %815 = vmatpush1.msra.mxu0 0.0
        %816 = vmatprep.subr.mxu0 0.0
        %817 = vmatpush1.msra.mxu0 0.0
        %818 = vmatprep.subr.mxu0 0.0
        %819 = vmatpush1.msra.mxu0 0.0
        %820 = vmatprep.subr.mxu0 0.0
        %821 = vmatpush1.msra.mxu0 0.0
        %822 = vmatprep.subr.mxu0 0.0
        %823 = vmatpush1.msra.mxu0 0.0
        %824 = vmatprep.subr.mxu0 0.0
        %825 = vmatpush1.msra.mxu0 0.0
        %826 = vmatprep.subr.mxu0 0.0
        %827 = vmatpush1.msra.mxu0 0.0
        %828 = vmatprep.subr.mxu0 0.0
        %829 = vmatpush1.msra.mxu0 0.0
        %830 = vmatprep.subr.mxu0 0.0
        %831 = vmatpush1.msra.mxu0 0.0
        %832 = vmatprep.subr.mxu0 0.0
        %833 = vmatpush1.msra.mxu0 0.0
        %834 = vmatprep.subr.mxu0 0.0
        %835 = vmatpush1.msra.mxu0 0.0
        %836 = vmatprep.subr.mxu0 0.0
        %837 = vmatpush1.msra.mxu0 0.0
        %838 = vmatprep.subr.mxu0 0.0
        %839 = vmatpush1.msra.mxu0 0.0
        %840 = vmatprep.subr.mxu0 0.0
        %841 = vmatpush1.msra.mxu0 0.0
        %842 = vmatprep.subr.mxu0 0.0
        %843 = vmatpush1.msra.mxu0 0.0
        %844 = vmatprep.subr.mxu0 0.0
        %845 = vmatpush1.msra.mxu0 0.0
        %846 = vmatprep.subr.mxu0 0.0
        %847 = vmatpush1.msra.mxu0 0.0
        %848 = vmatprep.subr.mxu0 0.0
        %849 = vmatpush1.msra.mxu0 0.0
        %850 = vmatprep.subr.mxu0 0.0
        %851 = vmatpush1.msra.mxu0 0.0
        %852 = vmatprep.mubr.f32.mxu0 0.0
        %853 = vmatmul.mubr.f32.gmra.mrb[0].mxu0 %v783
        %v854 = vpop.f32.mrb[0].mxu0
        %v855 = vadd.f32 0.0, %v854
        %v856 = vpop.f32.mrb[0].mxu0
        %857 = vmatprep.mubr.f32.mxu0 0.0
        %858 = vmatmul.mubr.f32.gmra.mrb[0].mxu0 %v786
        %v859 = vpop.f32.mrb[0].mxu0
        %v860 = vadd.f32 0.0, %v859
        %v861 = vpop.f32.mrb[0].mxu0
        %862 = vdwg.mxu0
        %s863 = scalar_lea.vmem %s395, 16 [#allocation8]
        %864 = vst.msk [vmem:[%s863] sm:$0xff] %vm431, %v855
        %865 = vst.msk [vmem:[%s863 + $0x8] sm:$0xff] %vm431, %v860
        %s866 = sand.u32 %s174, 1
        %s867 = scalar_lea.sflag [#allocation4], %s866
        %s868 = sand.u32 %s174, 1
        %s869 = smul.addr %s868, 32
        %s870 = scalar_lea.vmem [#allocation8], %s869
        %s871 = sand.u32 %s204, 1
        %s872 = scalar_lea.sflag [#allocation10], %s871
        %s873 = sand.u32 %s204, 1
        %s874 = smul.addr %s873, 32
        %s875 = scalar_lea.vmem [#allocation9], %s874
        // Predicated region
        $region49: #{tpu_custom_call.1} parent=35 // pred_check
          %p876 = pneg %p184
        $region50: #{tpu_custom_call.1} parent=35 // pred_check_branch
          %878 = sbr.rel (%p876) target = $region52
        $region51: #{tpu_custom_call.1} parent=35 // pred_region
          %s879 = smul.u32 2, %s35
          %s880 = smul.u32 2, %s36
          %s882 = ssub.s32 512, 512
          %883 = vsyncadd %s867, %s882
          %s884 = smul.addr %s879, 2
          %s885 = sadd.s32 %s880, %s884
          %s886 = smul.addr %s34, 16
          %s887 = sadd.s32 %s885, %s886
          %s888 = smul.addr %s887, 128
          %s889 = scalar_lea.hbm %s4, %s888
          %s890 = sshll.u32 %s870, 4
          %s891 = int_to_ptr.vmem [resolvable:$true] %s890
          %896 = dma.vmem_to_hbm [thread:$0]  %s891, 512, %s889, %s867, 128, 128, 8
        $region52: #{tpu_custom_call.1} parent=35 // pred_fallthru
          _
        // Predicated region
        $region53: #{tpu_custom_call.1} parent=35 // pred_check
          %p897 = pneg %p214
        $region54: #{tpu_custom_call.1} parent=35 // pred_check_branch
          %899 = sbr.rel (%p897) target = $region56
        $region55: #{tpu_custom_call.1} parent=35 // pred_region
          %s900 = smul.u32 2, %s35
          %s901 = smul.u32 2, %s36
          %s903 = ssub.s32 512, 512
          %904 = vsyncadd %s872, %s903
          %s905 = smul.addr %s900, 2
          %s906 = sadd.s32 %s901, %s905
          %s907 = smul.addr %s34, 16
          %s908 = sadd.s32 %s906, %s907
          %s909 = smul.addr %s908, 128
          %s910 = scalar_lea.hbm %s5, %s909
          %s911 = sshll.u32 %s875, 4
          %s912 = int_to_ptr.vmem [resolvable:$true] %s911
          %917 = dma.vmem_to_hbm [thread:$0]  %s912, 512, %s910, %s872, 128, 128, 8
        $region56: #{tpu_custom_call.1} parent=35 // pred_fallthru
          _
      $region36: #{tpu_custom_call.1} parent=5 // pred_fallthru
        _
      %p918 = scmp.le.s32.totalorder 2, %s24
      // Predicated region
      $region57: #{tpu_custom_call.1} parent=5 // pred_check
        %p919 = pneg %p918
      $region58: #{tpu_custom_call.1} parent=5 // pred_check_branch
        %921 = sbr.rel (%p919) target = $region60
      $region59: #{tpu_custom_call.1} parent=5 // pred_region
        %s922 = ssub.s32 %s24, 2
        // Predicated region
        $region61: #{tpu_custom_call.1} parent=59 // pred_check
          %p923 = pneg %p190
        $region62: #{tpu_custom_call.1} parent=59 // pred_check_branch
          %925 = sbr.rel (%p923) target = $region64
        $region63: #{tpu_custom_call.1} parent=59 // pred_region
          %s926 = sand.u32 %s175, 1
          %s927 = scalar_lea.sflag [#allocation4], %s926
          %s928 = sand.u32 %s175, 1
          %s929 = smul.addr %s928, 32
          %s930 = scalar_lea.vmem [#allocation8], %s929
          %931 = dma.done %s927, 512
        $region64: #{tpu_custom_call.1} parent=59 // pred_fallthru
          _
        // Predicated region
        $region65: #{tpu_custom_call.1} parent=59 // pred_check
          %p932 = pneg %p220
        $region66: #{tpu_custom_call.1} parent=59 // pred_check_branch
          %934 = sbr.rel (%p932) target = $region68
        $region67: #{tpu_custom_call.1} parent=59 // pred_region
          %s935 = sand.u32 %s205, 1
          %s936 = scalar_lea.sflag [#allocation10], %s935
          %s937 = sand.u32 %s205, 1
          %s938 = smul.addr %s937, 32
          %s939 = scalar_lea.vmem [#allocation9], %s938
          %940 = dma.done %s936, 512
        $region68: #{tpu_custom_call.1} parent=59 // pred_fallthru
          _
      $region60: #{tpu_custom_call.1} parent=5 // pred_fallthru
        _
    $region6: #{tpu_custom_call.1} parent=1 // loop_footer
      %s28 = sadd.s32 1, %s24
    $region7: #{tpu_custom_call.1} parent=1 // loop_footer_branch
      %23 = sbr.rel target = $region3
    $region8: #{tpu_custom_call.1} parent=1 // loop_exit
      _
    %941 = vsyncpa [#allocation3], 1
    %s942 = scalar_lea.sflag [#allocation3], 1
    %943 = vsyncpa %s942, 1
    %944 = vsyncpa [#allocation6], 1
    %s945 = scalar_lea.sflag [#allocation6], 1
    %946 = vsyncpa %s945, 1
    %947 = vsyncpa [#allocation4], 1
    %s948 = scalar_lea.sflag [#allocation4], 1
    %949 = vsyncpa %s948, 1
    %950 = vsyncpa [#allocation10], 1
    %s951 = scalar_lea.sflag [#allocation10], 1
    %952 = vsyncpa %s951, 1

</llo_original>
